<compile_context>
chip_gen: v6e
topology: v6e:2x2x1
jax: 0.10.0
libtpu: 0.0.40
codegen_flags: <defaults>
</compile_context>

<pallas_src>
import functools

import jax
import jax.numpy as jnp
from jax import lax
from jax.experimental import pallas as pl
from jax.experimental.pallas import tpu as pltpu

_SQRT_HALF = 0.7071067811865476
_LN_EPS = 1e-5


def _round_up(x, m):
    return (x + m - 1) // m * m


def _detect_num_tensorcores():
    """2 on v7x (two TensorCores share 'parallel' grid axes), else 1."""
    try:
        kind = jax.devices()[0].device_kind.lower()
        if "v7" in kind:
            return 2
    except Exception:
        pass
    return 1


def _vmem_ceiling_bytes():
    """Physical VMEM minus headroom for Mosaic internal scratch."""
    try:
        cap = int(pltpu.get_tpu_info().vmem_capacity_bytes)
    except Exception:
        cap = 64 << 20          # v7x worst case
    return max(cap - (12 << 20), 32 << 20)


def _lm_head_kernel(x_ref, dwt_ref, db_ref, lng_ref, lnb_ref,
                    decwt_ref, decb_ref, out_ref, h_scratch):
    # Grid: (row tiles, vocab tiles), vocab axis last / sequential.  The
    # dense+LN+GELU intermediate depends only on the row tile, so it is
    # computed once per row tile (j == 0) into VMEM scratch; every vocab tile
    # then only runs one MXU matmul against its decoder-weight slab.
    j = pl.program_id(1)

    @pl.when(j == 0)
    def _():
        # dense: x @ Wd + bd    (bf16 operands, f32 accumulation)
        h = jnp.dot(x_ref[...], dwt_ref[...],
                    preferred_element_type=jnp.float32) + db_ref[...]
        # LayerNorm over hidden dim (all f32)
        mu = jnp.mean(h, axis=-1, keepdims=True)
        var = jnp.mean((h - mu) * (h - mu), axis=-1, keepdims=True)
        hn = (h - mu) * lax.rsqrt(var + _LN_EPS)
        hn = hn * lng_ref[...] + lnb_ref[...]
        # exact GELU (matches torch.nn.functional.gelu default)
        g = 0.5 * hn * (1.0 + lax.erf(hn * _SQRT_HALF))
        # bf16 scratch halves the carried footprint; this quantization is why
        # the test tolerance is ~3e-2 (use f32 scratch if tighter is needed).
        h_scratch[...] = g.astype(h_scratch.dtype)

    # decoder: g @ Wdec[:, tile] + bdec[tile]   (bf16 operands, f32 acc)
    out_ref[...] = (
        jnp.dot(h_scratch[...], decwt_ref[...],
                preferred_element_type=jnp.float32) + decb_ref[...]
    ).astype(out_ref.dtype)


def prepare_lm_head_params(dense_wt, dense_b, ln_g, ln_b, dec_wt, dec_b,
                           *, tile_v=512):
    """One-time weight prep (bf16 cast + vocab padding), hoisted out of the
    per-call path so the kernel wrapper does no weight-sized HBM copies.

    dense_wt: [H, H] ([in, out] layout, i.e. torch nn.Linear weight.T).
    dec_wt:   [H, V] ([in, out] layout).
    """
    H = dense_wt.shape[0]
    V = dec_wt.shape[1]
    tv = _round_up(min(tile_v, _round_up(V, 128)), 128)
    v_pad = _round_up(V, tv)

    dwt = jnp.asarray(dense_wt, jnp.bfloat16)
    db = jnp.reshape(jnp.asarray(dense_b, jnp.float32), (1, H))
    lg = jnp.reshape(jnp.asarray(ln_g, jnp.float32), (1, H))
    lb = jnp.reshape(jnp.asarray(ln_b, jnp.float32), (1, H))
    dwv = jnp.asarray(dec_wt, jnp.bfloat16)
    dcb = jnp.reshape(jnp.asarray(dec_b, jnp.float32), (1, V))
    if v_pad != V:
        dwv = jnp.pad(dwv, ((0, 0), (0, v_pad - V)))
        dcb = jnp.pad(dcb, ((0, 0), (0, v_pad - V)))
    return (dwt, db, lg, lb, dwv, dcb)


@functools.partial(
    jax.jit,
    static_argnames=("vocab_size", "tile_n", "tile_v", "out_dtype",
                     "num_cores"))
def lm_head(x, dense_wt, dense_b, ln_g, ln_b, dec_wt, dec_b, *,
            vocab_size, tile_n=512, tile_v=512, out_dtype=jnp.bfloat16,
            num_cores=None):
    """x: [N, H] f32/bf16. Weights as produced by prepare_lm_head_params
    (bf16, vocab already padded to a multiple of the vocab tile)."""
    N, H = x.shape
    v_in = dec_wt.shape[1]

    # --- effective tile sizes ------------------------------------------------
    # Row tile: multiple of 16 (bf16 row packing), as large as the row extent.
    n_aligned = _round_up(N, 16)
    tn = max(16, min(_round_up(tile_n, 16), n_aligned))
    cores = _detect_num_tensorcores() if num_cores is None else num_cores
    # v7x (2 TCs): keep >= `cores` row tiles (when N allows) so the "parallel"
    # axis feeds both TensorCores; single-TC chips keep one big row tile so
    # the decoder weight is streamed from HBM only once.
    if cores > 1 and n_aligned >= 16 * cores and pl.cdiv(n_aligned, tn) < cores:
        tn = _round_up(pl.cdiv(n_aligned, cores), 16)
    n_pad = _round_up(N, tn)

    tv = _round_up(min(tile_v, _round_up(v_in, 128)), 128)
    v_pad = _round_up(v_in, tv)

    xb = x.astype(jnp.bfloat16)
    if n_pad != N:
        xb = jnp.pad(xb, ((0, n_pad - N), (0, 0)))
    if v_pad != v_in:  # no-op when weights came from prepare_lm_head_params
        dec_wt = jnp.pad(dec_wt, ((0, 0), (0, v_pad - v_in)))
        dec_b = jnp.pad(dec_b, ((0, 0), (0, v_pad - v_in)))

    grid = (n_pad // tn, v_pad // tv)
    out_bytes = jnp.dtype(out_dtype).itemsize

    # --- VMEM budget: double-buffered tiles + single-buffer scratch ---------
    # (the pipeliner's double buffering IS the 2x; no extra factor on top)
    # TODO(synk): mark the constant-index operands (dense W/b, LN gamma/beta)
    # pipeline_mode=pl.Buffered(1) to reclaim their second buffer once that
    # path is exercised in CI.
    bytes_needed = (
        2 * tn * H * 2                 # x row tile (bf16)
        + 2 * H * H * 2                # dense weight (constant block, bf16)
        + 2 * 3 * H * 4                # dense bias / LN gamma / LN beta (f32)
        + 2 * (H * tv * 2 + tv * 4)    # decoder weight tile (bf16) + bias (f32)
        + 2 * tn * tv * out_bytes      # output tile
        + tn * H * 2                   # h scratch (bf16, single buffer)
    )
    vmem_limit = int(min(max(bytes_needed + (4 << 20), 16 << 20),
                         _vmem_ceiling_bytes()))

    n_row_tiles = n_pad // tn
    cost = pl.CostEstimate(
        flops=2 * n_pad * H * (H + v_pad),
        transcendentals=n_pad * H,                             # erf in GELU
        bytes_accessed=(n_pad * H * 2                          # x (bf16)
                        + n_row_tiles * H * (H + v_pad) * 2    # weights (bf16)
                        + n_pad * v_pad * out_bytes))          # logits

    out = pl.pallas_call(
        _lm_head_kernel,
        out_shape=jax.ShapeDtypeStruct((n_pad, v_pad), out_dtype),
        grid_spec=pltpu.PrefetchScalarGridSpec(
            num_scalar_prefetch=0,
            grid=grid,
            in_specs=[
                pl.BlockSpec((tn, H), lambda i, j: (i, 0)),    # x rows
                pl.BlockSpec((H, H), lambda i, j: (0, 0)),     # dense W
                pl.BlockSpec((1, H), lambda i, j: (0, 0)),     # dense b
                pl.BlockSpec((1, H), lambda i, j: (0, 0)),     # LN gamma
                pl.BlockSpec((1, H), lambda i, j: (0, 0)),     # LN beta
                pl.BlockSpec((H, tv), lambda i, j: (0, j)),    # decoder W
                pl.BlockSpec((1, tv), lambda i, j: (0, j)),    # decoder b
            ],
            out_specs=pl.BlockSpec((tn, tv), lambda i, j: (i, j)),
            scratch_shapes=[pltpu.VMEM((tn, H), jnp.bfloat16)],
        ),
        compiler_params=pltpu.CompilerParams(
            # Row-tile axis is independent -> "parallel" (2 TCs on v7x).
            # Vocab axis carries h_scratch -> must stay "arbitrary" and last.
            dimension_semantics=("parallel", "arbitrary"),
            vmem_limit_bytes=vmem_limit),
        cost_estimate=cost,
    )(xb, dense_wt, dense_b, ln_g, ln_b, dec_wt, dec_b)

    if n_pad != N:
        out = out[:N]
    if v_pad != vocab_size:
        # Prefer a 128-aligned vocab (e.g. 50304) so this copy never happens.
        out = out[:, :vocab_size]
    return out


def _reference(x, dense_wt, dense_b, ln_g, ln_b, dec_wt, dec_b):
    h = x @ dense_wt + dense_b
    mu = jnp.mean(h, axis=-1, keepdims=True)
    var = jnp.mean((h - mu) ** 2, axis=-1, keepdims=True)
    hn = (h - mu) / jnp.sqrt(var + _LN_EPS) * ln_g + ln_b
    g = 0.5 * hn * (1.0 + lax.erf(hn * _SQRT_HALF))
    return g @ dec_wt + dec_b


if __name__ == "__main__":
    # toy config: hidden_size=32, vocab_size=256; features: batch=2, seq=8
    # (not performance-representative: production H should be a multiple of
    # 128 and the vocab 128-aligned, e.g. 50304)
    B, S, H, V = 2, 8, 32, 256
    key = jax.random.PRNGKey(0)
    kx, kd, kdb, kg, kb, kw, kwb = jax.random.split(key, 7)

    features = jax.random.normal(kx, (B, S, H), dtype=jnp.float32)

    # deterministic synthetic params (shapes match nn.Linear / nn.LayerNorm)
    dense_wt = jax.random.normal(kd, (H, H), dtype=jnp.float32) * 0.05   # [in,out]
    dense_b = jax.random.normal(kdb, (1, H), dtype=jnp.float32) * 0.02
    ln_g = 1.0 + 0.1 * jax.random.normal(kg, (1, H), dtype=jnp.float32)
    ln_b = 0.1 * jax.random.normal(kb, (1, H), dtype=jnp.float32)
    dec_wt = jax.random.normal(kw, (H, V), dtype=jnp.float32) * 0.05     # [in,out]
    dec_b = jax.random.normal(kwb, (1, V), dtype=jnp.float32) * 0.02

    # one-time weight prep (bf16 cast + vocab padding), reused across calls
    params = prepare_lm_head_params(dense_wt, dense_b, ln_g, ln_b,
                                    dec_wt, dec_b)
    params = jax.block_until_ready(params)

    x2d = features.reshape(B * S, H)
    out = lm_head(x2d, *params, vocab_size=V)
    out = jax.block_until_ready(out)

    ref = _reference(x2d, dense_wt, dense_b, ln_g, ln_b, dec_wt, dec_b)
    assert out.shape == (B * S, V)
    assert out.dtype == jnp.bfloat16
    # bf16 weight/activation/logit streaming -> looser tolerance than pure f32
    assert jnp.allclose(out.astype(jnp.float32), ref, atol=3e-2, rtol=3e-2), \
        "mismatch vs reference"

    logits = out.reshape(B, S, V)  # final shape matches torch: [B, S, vocab]
    jax.block_until_ready(logits)
    print("KERNEL_OK")
</pallas_src>

<mosaic_0001>
module attributes {stable_mosaic.version = 11 : i64} {
  func.func @_lm_head_kernel(%arg0: i32, %arg1: i32, %arg2: memref<16x32xbf16, #tpu.memory_space<vmem>>, %arg3: memref<32x32xbf16, #tpu.memory_space<vmem>>, %arg4: memref<1x32xf32, #tpu.memory_space<vmem>>, %arg5: memref<1x32xf32, #tpu.memory_space<vmem>>, %arg6: memref<1x32xf32, #tpu.memory_space<vmem>>, %arg7: memref<32x256xbf16, #tpu.memory_space<vmem>>, %arg8: memref<1x256xf32, #tpu.memory_space<vmem>>, %arg9: memref<16x256xbf16, #tpu.memory_space<vmem>>, %arg10: memref<16x32xbf16, #tpu.memory_space<vmem>>) attributes {dimension_semantics = [#tpu.dimension_semantics<parallel>, #tpu.dimension_semantics<arbitrary>], iteration_bounds = array<i64: 1, 1>, scalar_prefetch = 0 : i64, scratch_operands = 1 : i64, tpu.core_type = #tpu.core_type<tc>, window_params = [{transform_indices = @transform_0, window_bounds = array<i64: 16, 32>}, {pipeline_mode = #tpu.pipeline_mode<synchronous>, transform_indices = @transform_1, window_bounds = array<i64: 32, 32>}, {pipeline_mode = #tpu.pipeline_mode<synchronous>, transform_indices = @transform_2, window_bounds = array<i64: 1, 32>}, {pipeline_mode = #tpu.pipeline_mode<synchronous>, transform_indices = @transform_3, window_bounds = array<i64: 1, 32>}, {pipeline_mode = #tpu.pipeline_mode<synchronous>, transform_indices = @transform_4, window_bounds = array<i64: 1, 32>}, {transform_indices = @transform_5, window_bounds = array<i64: 32, 256>}, {transform_indices = @transform_6, window_bounds = array<i64: 1, 256>}, {transform_indices = @transform_7, window_bounds = array<i64: 16, 256>}]} {
    %c0_i32 = arith.constant 0 : i32
    %0 = arith.cmpi eq, %arg1, %c0_i32 : i32
    %1 = arith.extui %0 : i1 to i32
    %c0_i32_0 = arith.constant 0 : i32
    %2 = arith.cmpi ne, %1, %c0_i32_0 : i32
    scf.if %2 {
      %c0_8 = arith.constant 0 : index
      %c0_9 = arith.constant 0 : index
      %11 = vector.load %arg2[%c0_8, %c0_9] : memref<16x32xbf16, #tpu.memory_space<vmem>>, vector<16x32xbf16>
      %c0_10 = arith.constant 0 : index
      %c0_11 = arith.constant 0 : index
      %12 = vector.load %arg3[%c0_10, %c0_11] : memref<32x32xbf16, #tpu.memory_space<vmem>>, vector<32x32xbf16>
      %cst_12 = arith.constant dense<0.000000e+00> : vector<16x32xf32>
      %13 = tpu.matmul %11, %12, %cst_12 {dimension_numbers = #tpu.dot_dimension_numbers<[1], [0], [0], [1], [0, 0, 1, 1], [], []>} : vector<16x32xbf16>, vector<32x32xbf16>, vector<16x32xf32> -> vector<16x32xf32>
      %c0_13 = arith.constant 0 : index
      %c0_14 = arith.constant 0 : index
      %14 = vector.load %arg4[%c0_13, %c0_14] : memref<1x32xf32, #tpu.memory_space<vmem>>, vector<1x32xf32>
      %15 = vector.broadcast %14 : vector<1x32xf32> to vector<16x32xf32>
      %16 = arith.addf %13, %15 : vector<16x32xf32>
      %cst_15 = arith.constant dense<0.000000e+00> : vector<16xf32>
      %17 = vector.multi_reduction <add>, %16, %cst_15 [1] : vector<16x32xf32> to vector<16xf32>
      %18 = vector.shape_cast %17 : vector<16xf32> to vector<16x1xf32>
      %cst_16 = arith.constant 3.200000e+01 : f32
      %19 = vector.broadcast %cst_16 : f32 to vector<16x1xf32>
      %20 = arith.divf %18, %19 : vector<16x1xf32>
      %21 = vector.broadcast %20 : vector<16x1xf32> to vector<16x32xf32>
      %22 = arith.subf %16, %21 : vector<16x32xf32>
      %23 = vector.broadcast %20 : vector<16x1xf32> to vector<16x32xf32>
      %24 = arith.subf %16, %23 : vector<16x32xf32>
      %25 = arith.mulf %22, %24 : vector<16x32xf32>
      %cst_17 = arith.constant dense<0.000000e+00> : vector<16xf32>
      %26 = vector.multi_reduction <add>, %25, %cst_17 [1] : vector<16x32xf32> to vector<16xf32>
      %27 = vector.shape_cast %26 : vector<16xf32> to vector<16x1xf32>
      %cst_18 = arith.constant 3.200000e+01 : f32
      %28 = vector.broadcast %cst_18 : f32 to vector<16x1xf32>
      %29 = arith.divf %27, %28 : vector<16x1xf32>
      %30 = vector.broadcast %20 : vector<16x1xf32> to vector<16x32xf32>
      %31 = arith.subf %16, %30 : vector<16x32xf32>
      %cst_19 = arith.constant 9.99999974E-6 : f32
      %32 = vector.broadcast %cst_19 : f32 to vector<16x1xf32>
      %33 = arith.addf %29, %32 : vector<16x1xf32>
      %34 = math.rsqrt %33 : vector<16x1xf32>
      %35 = vector.broadcast %34 : vector<16x1xf32> to vector<16x32xf32>
      %36 = arith.mulf %31, %35 : vector<16x32xf32>
      %c0_20 = arith.constant 0 : index
      %c0_21 = arith.constant 0 : index
      %37 = vector.load %arg5[%c0_20, %c0_21] : memref<1x32xf32, #tpu.memory_space<vmem>>, vector<1x32xf32>
      %38 = vector.broadcast %37 : vector<1x32xf32> to vector<16x32xf32>
      %39 = arith.mulf %36, %38 : vector<16x32xf32>
      %c0_22 = arith.constant 0 : index
      %c0_23 = arith.constant 0 : index
      %40 = vector.load %arg6[%c0_22, %c0_23] : memref<1x32xf32, #tpu.memory_space<vmem>>, vector<1x32xf32>
      %41 = vector.broadcast %40 : vector<1x32xf32> to vector<16x32xf32>
      %42 = arith.addf %39, %41 : vector<16x32xf32>
      %cst_24 = arith.constant 5.000000e-01 : f32
      %43 = vector.broadcast %cst_24 : f32 to vector<16x32xf32>
      %44 = arith.mulf %43, %42 : vector<16x32xf32>
      %cst_25 = arith.constant 0.707106769 : f32
      %45 = vector.broadcast %cst_25 : f32 to vector<16x32xf32>
      %46 = arith.mulf %42, %45 : vector<16x32xf32>
      %47 = math.erf %46 : vector<16x32xf32>
      %cst_26 = arith.constant 1.000000e+00 : f32
      %48 = vector.broadcast %cst_26 : f32 to vector<16x32xf32>
      %49 = arith.addf %48, %47 : vector<16x32xf32>
      %50 = arith.mulf %44, %49 : vector<16x32xf32>
      %51 = arith.truncf %50 : vector<16x32xf32> to vector<16x32xbf16>
      %c0_27 = arith.constant 0 : index
      %c0_28 = arith.constant 0 : index
      %52 = vector.load %arg10[%c0_27, %c0_28] : memref<16x32xbf16, #tpu.memory_space<vmem>>, vector<16x32xbf16>
      tpu.vector_store %arg10[%c0_27, %c0_28], %51 {strides = array<i32>} : memref<16x32xbf16, #tpu.memory_space<vmem>>, vector<16x32xbf16>,
    } else {
    }
    %c0 = arith.constant 0 : index
    %c0_1 = arith.constant 0 : index
    %3 = vector.load %arg10[%c0, %c0_1] : memref<16x32xbf16, #tpu.memory_space<vmem>>, vector<16x32xbf16>
    %c0_2 = arith.constant 0 : index
    %c0_3 = arith.constant 0 : index
    %4 = vector.load %arg7[%c0_2, %c0_3] : memref<32x256xbf16, #tpu.memory_space<vmem>>, vector<32x256xbf16>
    %cst = arith.constant dense<0.000000e+00> : vector<16x256xf32>
    %5 = tpu.matmul %3, %4, %cst {dimension_numbers = #tpu.dot_dimension_numbers<[1], [0], [0], [1], [0, 0, 1, 1], [], []>} : vector<16x32xbf16>, vector<32x256xbf16>, vector<16x256xf32> -> vector<16x256xf32>
    %c0_4 = arith.constant 0 : index
    %c0_5 = arith.constant 0 : index
    %6 = vector.load %arg8[%c0_4, %c0_5] : memref<1x256xf32, #tpu.memory_space<vmem>>, vector<1x256xf32>
    %7 = vector.broadcast %6 : vector<1x256xf32> to vector<16x256xf32>
    %8 = arith.addf %5, %7 : vector<16x256xf32>
    %9 = arith.truncf %8 : vector<16x256xf32> to vector<16x256xbf16>
    %c0_6 = arith.constant 0 : index
    %c0_7 = arith.constant 0 : index
    %10 = vector.load %arg9[%c0_6, %c0_7] : memref<16x256xbf16, #tpu.memory_space<vmem>>, vector<16x256xbf16>
    tpu.vector_store %arg9[%c0_6, %c0_7], %9 {strides = array<i32>} : memref<16x256xbf16, #tpu.memory_space<vmem>>, vector<16x256xbf16>,
    return
  }
  func.func @transform_0(%arg0: i32, %arg1: i32) -> (i32, i32) {
    %c0_i32 = arith.constant 0 : i32
    %c0_i32_0 = arith.constant 0 : i32
    return %arg0, %c0_i32 : i32, i32
  }
  func.func @transform_1(%arg0: i32, %arg1: i32) -> (i32, i32) {
    %c0_i32 = arith.constant 0 : i32
    %c0_i32_0 = arith.constant 0 : i32
    %c0_i32_1 = arith.constant 0 : i32
    return %c0_i32, %c0_i32_0 : i32, i32
  }
  func.func @transform_2(%arg0: i32, %arg1: i32) -> (i32, i32) {
    %c0_i32 = arith.constant 0 : i32
    %c0_i32_0 = arith.constant 0 : i32
    %c0_i32_1 = arith.constant 0 : i32
    return %c0_i32, %c0_i32_0 : i32, i32
  }
  func.func @transform_3(%arg0: i32, %arg1: i32) -> (i32, i32) {
    %c0_i32 = arith.constant 0 : i32
    %c0_i32_0 = arith.constant 0 : i32
    %c0_i32_1 = arith.constant 0 : i32
    return %c0_i32, %c0_i32_0 : i32, i32
  }
  func.func @transform_4(%arg0: i32, %arg1: i32) -> (i32, i32) {
    %c0_i32 = arith.constant 0 : i32
    %c0_i32_0 = arith.constant 0 : i32
    %c0_i32_1 = arith.constant 0 : i32
    return %c0_i32, %c0_i32_0 : i32, i32
  }
  func.func @transform_5(%arg0: i32, %arg1: i32) -> (i32, i32) {
    %c0_i32 = arith.constant 0 : i32
    %c0_i32_0 = arith.constant 0 : i32
    return %c0_i32, %arg1 : i32, i32
  }
  func.func @transform_6(%arg0: i32, %arg1: i32) -> (i32, i32) {
    %c0_i32 = arith.constant 0 : i32
    %c0_i32_0 = arith.constant 0 : i32
    return %c0_i32, %arg1 : i32, i32
  }
  func.func @transform_7(%arg0: i32, %arg1: i32) -> (i32, i32) {
    %c0_i32 = arith.constant 0 : i32
    return %arg0, %arg1 : i32, i32
  }
}

</mosaic_0001>

<llo_original>
// kernel: lm_head.1
$region0: #{lm_head.1}
  #allocation0 [shape = 'u32[]', space=smem, size = 0x4, offset = 0x4, fixed_abs, tag = 'smem constant byte address 0x4 - core index']
  #allocation1 [shape = 'u32[144,128]{1,0:T(1,128)}', space=vmem, size = 0x12000, scoped, tag = 'internal scratch']
  #allocation2 [shape = 'bf16[16,32]{1,0:T(8,128)(2,1)}', space=vmem, size = 0x1000, scoped, tag = 'scratch operand']
  %s0 = inlined_call_operand.vmem [shape: bf16[16,32], index: 0, kind: input, shape index: {}]
  %s1 = inlined_call_operand.hbm [shape: bf16[32,32], index: 1, kind: input, shape index: {}]
  %s2 = inlined_call_operand.hbm [shape: f32[1,32], index: 2, kind: input, shape index: {}]
  %s3 = inlined_call_operand.hbm [shape: f32[1,32], index: 3, kind: input, shape index: {}]
  %s4 = inlined_call_operand.hbm [shape: f32[1,32], index: 4, kind: input, shape index: {}]
  %s5 = inlined_call_operand.vmem [shape: bf16[32,256], index: 5, kind: input, shape index: {}]
  %s6 = inlined_call_operand.vmem [shape: f32[1,256], index: 6, kind: input, shape index: {}]
  %s7 = inlined_call_operand.hbm [shape: bf16[16,256], index: 7, kind: output, shape index: {}]
  %s8 = sld [smem:[#allocation0]]
  $region58: #{lm_head.1} parent=0
    _
  %s10 = ssub.s32 1, %s8
  %s11 = scalar_select 0, %s10, %s8
  $region1: #{lm_head.1} parent=0
    #allocation3 [shape = 'u8[8192]{0}', space=vmem, size = 0x2000, scoped, tag = 'input window, operand 1, single buffered']
    #allocation4 [shape = 's32[1]{0}', space=sflag, size = 0x4, scoped, tag = 'scoped memory for lm_head.1']
    #allocation5 [shape = 's32[1]{0}', space=sflag, size = 0x4, scoped, tag = 'scoped memory for lm_head.1']
    #allocation6 [shape = 'u8[512]{0}', space=vmem, size = 0x400, scoped, tag = 'input window, operand 2, single buffered']
    #allocation7 [shape = 's32[1]{0}', space=sflag, size = 0x4, scoped, tag = 'scoped memory for lm_head.1']
    #allocation8 [shape = 'u8[512]{0}', space=vmem, size = 0x400, scoped, tag = 'input window, operand 3, single buffered']
    #allocation9 [shape = 'u8[512]{0}', space=vmem, size = 0x400, scoped, tag = 'input window, operand 4, single buffered']
    #allocation10 [shape = 's32[1]{0}', space=sflag, size = 0x4, scoped, tag = 'scoped memory for lm_head.1']
    #allocation11 [shape = 'u8[8192]{0}', space=vmem, size = 0x2000, scoped, tag = 'output window, operand 0, single buffered']
    %12 = vsyncpa [#allocation4], 0
    %13 = vsyncpa [#allocation7], 0
    %14 = vsyncpa [#allocation10], 0
    %15 = vsyncpa [#allocation5], 0
    // Predicated region
    $region2: #{lm_head.1} parent=1 // pred_check
      _
    $region3: #{lm_head.1} parent=1 // pred_check_branch
      %17 = sbr.rel (0) target = $region5
    $region4: #{lm_head.1} parent=1 // pred_region
      _
    $region5: #{lm_head.1} parent=1 // pred_fallthru
      _
    // Predicated region
    $region6: #{lm_head.1} parent=1 // pred_check
      _
    $region7: #{lm_head.1} parent=1 // pred_check_branch
      %19 = sbr.rel (0) target = $region9
    $region8: #{lm_head.1} parent=1 // pred_region
      %s21 = ssub.s32 256, 256
      %22 = vsyncadd [#allocation4], %s21
      %s23 = sshll.u32 [#allocation3], 4
      %s24 = int_to_ptr.vmem [resolvable:$true] %s23
      %29 = dma.hbm_to_vmem [thread:$0]  %s1, 256, %s24, [#allocation4], 64, 64, 4
    $region9: #{lm_head.1} parent=1 // pred_fallthru
      _
    // Predicated region
    $region10: #{lm_head.1} parent=1 // pred_check
      _
    $region11: #{lm_head.1} parent=1 // pred_check_branch
      %31 = sbr.rel (0) target = $region13
    $region12: #{lm_head.1} parent=1 // pred_region
      %s33 = ssub.s32 16, 16
      %34 = vsyncadd [#allocation7], %s33
      %s36 = sshll.u32 [#allocation6], 4
      %s37 = int_to_ptr.vmem [resolvable:$true] %s36
      %39 = dma.hbm_to_vmem [thread:$0]  %s2, 16, %s37, [#allocation7]
    $region13: #{lm_head.1} parent=1 // pred_fallthru
      _
    // Predicated region
    $region14: #{lm_head.1} parent=1 // pred_check
      _
    $region15: #{lm_head.1} parent=1 // pred_check_branch
      %41 = sbr.rel (0) target = $region17
    $region16: #{lm_head.1} parent=1 // pred_region
      %s43 = ssub.s32 16, 16
      %44 = vsyncadd [#allocation7], %s43
      %s46 = sshll.u32 [#allocation8], 4
      %s47 = int_to_ptr.vmem [resolvable:$true] %s46
      %49 = dma.hbm_to_vmem [thread:$0]  %s3, 16, %s47, [#allocation7]
    $region17: #{lm_head.1} parent=1 // pred_fallthru
      _
    // Predicated region
    $region18: #{lm_head.1} parent=1 // pred_check
      _
    $region19: #{lm_head.1} parent=1 // pred_check_branch
      %51 = sbr.rel (0) target = $region21
    $region20: #{lm_head.1} parent=1 // pred_region
      %s53 = ssub.s32 16, 16
      %54 = vsyncadd [#allocation10], %s53
      %s56 = sshll.u32 [#allocation9], 4
      %s57 = int_to_ptr.vmem [resolvable:$true] %s56
      %59 = dma.hbm_to_vmem [thread:$0]  %s4, 16, %s57, [#allocation10]
    $region21: #{lm_head.1} parent=1 // pred_fallthru
      _
    // Predicated region
    $region22: #{lm_head.1} parent=1 // pred_check
      _
    $region23: #{lm_head.1} parent=1 // pred_check_branch
      %61 = sbr.rel (0) target = $region25
    $region24: #{lm_head.1} parent=1 // pred_region
      _
    $region25: #{lm_head.1} parent=1 // pred_fallthru
      _
    // Predicated region
    $region26: #{lm_head.1} parent=1 // pred_check
      _
    $region27: #{lm_head.1} parent=1 // pred_check_branch
      %63 = sbr.rel (0) target = $region29
    $region28: #{lm_head.1} parent=1 // pred_region
      _
    $region29: #{lm_head.1} parent=1 // pred_fallthru
      _
    // Predicated region
    $region30: #{lm_head.1} parent=1 // pred_check
      _
    $region31: #{lm_head.1} parent=1 // pred_check_branch
      %65 = sbr.rel (0) target = $region33
    $region32: #{lm_head.1} parent=1 // pred_region
      %66 = dma.done [#allocation4], 256
    $region33: #{lm_head.1} parent=1 // pred_fallthru
      _
    // Predicated region
    $region34: #{lm_head.1} parent=1 // pred_check
      _
    $region35: #{lm_head.1} parent=1 // pred_check_branch
      %68 = sbr.rel (0) target = $region37
    $region36: #{lm_head.1} parent=1 // pred_region
      %69 = dma.done [#allocation7], 16
    $region37: #{lm_head.1} parent=1 // pred_fallthru
      _
    // Predicated region
    $region38: #{lm_head.1} parent=1 // pred_check
      _
    $region39: #{lm_head.1} parent=1 // pred_check_branch
      %71 = sbr.rel (0) target = $region41
    $region40: #{lm_head.1} parent=1 // pred_region
      %72 = dma.done [#allocation7], 16
    $region41: #{lm_head.1} parent=1 // pred_fallthru
      _
    // Predicated region
    $region42: #{lm_head.1} parent=1 // pred_check
      _
    $region43: #{lm_head.1} parent=1 // pred_check_branch
      %74 = sbr.rel (0) target = $region45
    $region44: #{lm_head.1} parent=1 // pred_region
      %75 = dma.done [#allocation10], 16
    $region45: #{lm_head.1} parent=1 // pred_fallthru
      _
    %p77 = scmp.eq.s32.totalorder 0, 0
    // Predicated region
    $region46: #{lm_head.1} parent=1 // pred_check
      %p78 = pneg %p77
    $region47: #{lm_head.1} parent=1 // pred_check_branch
      %80 = sbr.rel (%p78) target = $region49
    $region48: #{lm_head.1} parent=1 // pred_region
      %v81 = vld [vmem:[%s0] sm:$0xf]
      %v82 = vld [vmem:[%s0 + $0x4] sm:$0xf]
      %v83 = vld [vmem:[#allocation3] sm:$0xf]
      %v84 = vld [vmem:[#allocation3 + $0x4] sm:$0xf]
      %v85 = vld [vmem:[#allocation3 + $0x8] sm:$0xf]
      %v86 = vld [vmem:[#allocation3 + $0xc] sm:$0xf]
      %v87 = vld [vmem:[#allocation6] sm:$0x1]
      %v89 = vlaneseq
      %v90 = vshrl.u32 %v89, 7
      %v91 = vsub.s32 0, %v90
      %v92 = vrot.slane %v87, %v91
      %v96 = vunpack.c.l.b16 %v81
      %v97 = vunpack.c.l.b16 %v82
      %v98 = vpack.c.b16 %v97, %v96
      %v103 = vunpack.c.l.b16 %v83
      %v104 = vunpack.c.l.b16 %v84
      %v105 = vunpack.c.l.b16 %v85
      %v106 = vunpack.c.l.b16 %v86
      %v107 = vpack.c.b16 %v104, %v103
      %v108 = vpack.c.b16 %v106, %v105
      %vm111 = vcmask 261120
      %v113 = vsel %vm111, %v98, 0
      %115 = vmatprep.subr.bf16.mxu0 0
      %116 = vmatpush1.bf16.msra.mxu0 0
      %117 = vmatprep.subr.bf16.mxu0 0
      %118 = vmatpush1.bf16.msra.mxu0 0
      %119 = vmatprep.subr.bf16.mxu0 0
      %120 = vmatpush1.bf16.msra.mxu0 0
      %121 = vmatprep.subr.bf16.mxu0 0
      %122 = vmatpush1.bf16.msra.mxu0 0
      %123 = vmatprep.subr.bf16.mxu0 0
      %124 = vmatpush1.bf16.msra.mxu0 0
      %125 = vmatprep.subr.bf16.mxu0 0
      %126 = vmatpush1.bf16.msra.mxu0 0
      %127 = vmatprep.subr.bf16.mxu0 0
      %128 = vmatpush1.bf16.msra.mxu0 %v108
      %129 = vmatprep.subr.bf16.mxu0 0
      %130 = vmatpush1.bf16.msra.mxu0 %v107
      %131 = vmatprep.subr.bf16.mxu0 0
      %132 = vmatpush2.bf16.msra.mxu0 0
      %133 = vmatprep.subr.bf16.mxu0 0
      %134 = vmatpush2.bf16.msra.mxu0 0
      %135 = vmatprep.subr.bf16.mxu0 0
      %136 = vmatpush2.bf16.msra.mxu0 0
      %137 = vmatprep.subr.bf16.mxu0 0
      %138 = vmatpush2.bf16.msra.mxu0 0
      %139 = vmatprep.subr.bf16.mxu0 0
      %140 = vmatpush2.bf16.msra.mxu0 0
      %141 = vmatprep.subr.bf16.mxu0 0
      %142 = vmatpush2.bf16.msra.mxu0 0
      %143 = vmatprep.subr.bf16.mxu0 0
      %144 = vmatpush2.bf16.msra.mxu0 0
      %145 = vmatprep.subr.bf16.mxu0 0
      %146 = vmatpush2.bf16.msra.mxu0 0
      %147 = vmatprep.mubr.bf16.mxu0 0
      %148 = vmatmul.mubr.bf16.gmra.mxu0 %v113
      %v149 = vpop.f32.mrf.mxu0
      %v150 = vadd.f32 %v92, %v149
      %v151 = vpop.f32.mrf.mxu0
      %v152 = vpop.f32.mrf.mxu0
      %v153 = vadd.f32 %v92, %v152
      %v154 = vpop.f32.mrf.mxu0
      %155 = vdwg.mxu0
      %v156 = vsel %vm111, %v150, 0.0
      %157 = vadd.xlane.f32.xlu0 %v156
      %v158 = vpop.xlane.xlu0 %157
      %v159 = vsel %vm111, %v153, 0.0
      %160 = vadd.xlane.f32.xlu0 %v159
      %v161 = vpop.xlane.xlu0 %160
      %v162 = vrcp.pop 32.0
      %v163 = vmul.f32 %v158, %v162
      %v164 = vmul.f32 %v161, %v162
      %v165 = vsub.f32 %v150, %v163
      %v166 = vsub.f32 %v153, %v164
      %v167 = vmul.f32 %v165, %v165
      %v168 = vmul.f32 %v166, %v166
      %v169 = vsel %vm111, %v167, 0.0
      %170 = vadd.xlane.f32.xlu0 %v169
      %v171 = vpop.xlane.xlu0 %170
      %v172 = vsel %vm111, %v168, 0.0
      %173 = vadd.xlane.f32.xlu0 %v172
      %v174 = vpop.xlane.xlu0 %173
      %v175 = vmul.f32 %v171, %v162
      %v176 = vmul.f32 %v174, %v162
      %v177 = vadd.f32 %v175, 1e-05
      %v178 = vadd.f32 %v176, 1e-05
      %v179 = vrsqrt.pop %v177
      %v180 = vrsqrt.pop %v178
      %v181 = vmul.f32 %v165, %v179
      %v182 = vmul.f32 %v166, %v180
      %v183 = vld [vmem:[#allocation8] sm:$0x1]
      %v185 = vlaneseq
      %v186 = vshrl.u32 %v185, 7
      %v187 = vsub.s32 0, %v186
      %v188 = vrot.slane %v183, %v187
      %v190 = vmul.f32 %v181, %v188
      %v191 = vmul.f32 %v182, %v188
      %v192 = vld [vmem:[#allocation9] sm:$0x1]
      %v194 = vlaneseq
      %v195 = vshrl.u32 %v194, 7
      %v196 = vsub.s32 0, %v195
      %v197 = vrot.slane %v192, %v196
      %v199 = vadd.f32 %v190, %v197
      %v200 = vadd.f32 %v191, %v197
      %v201 = vmul.f32 %v199, 0.5
      %v202 = vmul.f32 %v200, 0.5
      %v203 = vmul.f32 %v199, 0.70710677
      %v204 = vmul.f32 %v200, 0.70710677
      %v205 = verf.f32.pop %v203
      %v206 = verf.f32.pop %v204
      %v207 = vadd.f32 %v205, 1.0
      %v208 = vadd.f32 %v206, 1.0
      %v209 = vmul.f32 %v201, %v207
      %v210 = vmul.f32 %v202, %v208
      %v211 = vpack.c.bf16 %v210, %v209
      %v213 = vunpack.c.l.b16 %v211
      %v214 = vunpack.c.h.b16 %v211
      %v215 = vpack.c.b16 %v213, %v213
      %v216 = vpack.c.b16 %v214, %v214
      %vm219 = vcmask 257024
      %220 = vst.msk [vmem:[#allocation2] sm:$0xf] %vm219, %v215
      %221 = vst.msk [vmem:[#allocation2 + $0x4] sm:$0xf] %vm219, %v216
    $region49: #{lm_head.1} parent=1 // pred_fallthru
      _
    %v222 = vld [vmem:[#allocation2] sm:$0xf]
    %v223 = vld [vmem:[#allocation2 + $0x4] sm:$0xf]
    %v224 = vld [vmem:[%s5] sm:$0xff]
    %v225 = vld [vmem:[%s5 + $0x8] sm:$0xff]
    %v226 = vld [vmem:[%s5 + $0x10] sm:$0xff]
    %v227 = vld [vmem:[%s5 + $0x18] sm:$0xff]
    %v228 = vld [vmem:[%s6] sm:$0x3]
    %v230 = vlaneseq
    %v231 = vshrl.u32 %v230, 7
    %v232 = vsub.s32 0, %v231
    %v233 = vrot.slane %v228, %v232
    %v234 = vlaneseq
    %v235 = vshrl.u32 %v234, 7
    %v236 = vsub.s32 1, %v235
    %v237 = vrot.slane %v228, %v236
    %v242 = vunpack.c.l.b16 %v222
    %v243 = vunpack.c.l.b16 %v223
    %v244 = vpack.c.b16 %v243, %v242
    %v249 = vunpack.c.l.b16 %v224
    %v250 = vunpack.c.h.b16 %v224
    %v251 = vunpack.c.l.b16 %v225
    %v252 = vunpack.c.h.b16 %v225
    %v253 = vunpack.c.l.b16 %v226
    %v254 = vunpack.c.h.b16 %v226
    %v255 = vunpack.c.l.b16 %v227
    %v256 = vunpack.c.h.b16 %v227
    %v257 = vpack.c.b16 %v251, %v249
    %v258 = vpack.c.b16 %v252, %v250
    %v259 = vpack.c.b16 %v255, %v253
    %v260 = vpack.c.b16 %v256, %v254
    %vm265 = vcmask 261120
    %v267 = vsel %vm265, %v244, 0
    %269 = vmatprep.subr.bf16.mxu0 0
    %270 = vmatpush1.bf16.msra.mxu0 0
    %271 = vmatprep.subr.bf16.mxu0 0
    %272 = vmatpush1.bf16.msra.mxu0 0
    %273 = vmatprep.subr.bf16.mxu0 0
    %274 = vmatpush1.bf16.msra.mxu0 0
    %275 = vmatprep.subr.bf16.mxu0 0
    %276 = vmatpush1.bf16.msra.mxu0 0
    %277 = vmatprep.subr.bf16.mxu0 0
    %278 = vmatpush1.bf16.msra.mxu0 0
    %279 = vmatprep.subr.bf16.mxu0 0
    %280 = vmatpush1.bf16.msra.mxu0 0
    %281 = vmatprep.subr.bf16.mxu0 %v260
    %282 = vmatpush1.bf16.msra.mxu0 %v259
    %283 = vmatprep.subr.bf16.mxu0 %v258
    %284 = vmatpush1.bf16.msra.mxu0 %v257
    %285 = vmatprep.subr.bf16.mxu0 0
    %286 = vmatpush2.bf16.msra.mxu0 0
    %287 = vmatprep.subr.bf16.mxu0 0
    %288 = vmatpush2.bf16.msra.mxu0 0
    %289 = vmatprep.subr.bf16.mxu0 0
    %290 = vmatpush2.bf16.msra.mxu0 0
    %291 = vmatprep.subr.bf16.mxu0 0
    %292 = vmatpush2.bf16.msra.mxu0 0
    %293 = vmatprep.subr.bf16.mxu0 0
    %294 = vmatpush2.bf16.msra.mxu0 0
    %295 = vmatprep.subr.bf16.mxu0 0
    %296 = vmatpush2.bf16.msra.mxu0 0
    %297 = vmatprep.subr.bf16.mxu0 0
    %298 = vmatpush2.bf16.msra.mxu0 0
    %299 = vmatprep.subr.bf16.mxu0 0
    %300 = vmatpush2.bf16.msra.mxu0 0
    %301 = vmatprep.mubr.bf16.mxu0 0
    %302 = vmatmul.mubr.bf16.gmra.mxu0 %v267
    %v303 = vpop.f32.mrf.mxu0
    %v304 = vadd.f32 %v233, %v303
    %v305 = vpop.f32.mrf.mxu0
    %v306 = vadd.f32 %v237, %v305
    %v307 = vpop.f32.mrf.mxu0
    %v308 = vadd.f32 %v233, %v307
    %v309 = vpop.f32.mrf.mxu0
    %v310 = vadd.f32 %v237, %v309
    %311 = vdwg.mxu0
    %v312 = vpack.c.bf16 %v308, %v304
    %v313 = vpack.c.bf16 %v310, %v306
    %v316 = vunpack.c.l.b16 %v312
    %v317 = vunpack.c.l.b16 %v313
    %v318 = vunpack.c.h.b16 %v312
    %v319 = vunpack.c.h.b16 %v313
    %v320 = vpack.c.b16 %v317, %v316
    %v321 = vpack.c.b16 %v319, %v318
    %324 = vst [vmem:[#allocation11] sm:$0xff] %v320
    %325 = vst [vmem:[#allocation11 + $0x8] sm:$0xff] %v321
    // Predicated region
    $region50: #{lm_head.1} parent=1 // pred_check
      _
    $region51: #{lm_head.1} parent=1 // pred_check_branch
      %327 = sbr.rel (0) target = $region53
    $region52: #{lm_head.1} parent=1 // pred_region
      %s329 = ssub.s32 256, 256
      %330 = vsyncadd [#allocation5], %s329
      %s331 = sshll.u32 [#allocation11], 4
      %s332 = int_to_ptr.vmem [resolvable:$true] %s331
      %337 = dma.vmem_to_hbm [thread:$0]  %s332, 256, %s7, [#allocation5], 128, 128, 8
    $region53: #{lm_head.1} parent=1 // pred_fallthru
      _
    // Predicated region
    $region54: #{lm_head.1} parent=1 // pred_check
      _
    $region55: #{lm_head.1} parent=1 // pred_check_branch
      %339 = sbr.rel (0) target = $region57
    $region56: #{lm_head.1} parent=1 // pred_region
      %340 = dma.done [#allocation5], 256
    $region57: #{lm_head.1} parent=1 // pred_fallthru
      _
    %341 = vsyncpa [#allocation4], 1
    %342 = vsyncpa [#allocation7], 1
    %343 = vsyncpa [#allocation10], 1
    %344 = vsyncpa [#allocation5], 1

</llo_original>
